<compile_context>
chip_gen: v7x
topology: tpu7x:2x2x1
jax: 0.10.0
libtpu: 0.0.40
codegen_flags: <defaults>
</compile_context>

<pallas_src>
import jax
import jax.numpy as jnp
from jax.experimental import pallas as pl
from jax.experimental.pallas import tpu as pltpu

# Small, deterministic problem sizes consistent with the module's forward.
N, CIN, H, W = 2, 4, 16, 16
COUT = 16
NUM_CLASSES = 8
KH = KW = 3
PAD = 1

KFLAT = KH * KW * CIN          # 36  (im2col contraction depth)
KTOT = KFLAT + 1               # 37  (+1 bias column folded into the matmul)
CP = 128                       # COUT padded to a full lane width
CLP = 128                      # NUM_CLASSES padded to a full lane width
OUT_ROWS = 8                   # per-image output rows, (8,128)-aligned store


def grid_detection_kernel(patches_ref, wconv_ref, whead_ref, bhead_ref, out_ref):
    """One image per grid step.

    patches_ref: (H*W, KTOT)     bf16  im2col patches for this image (+1.0 bias col)
    wconv_ref:   (KTOT, CP)      bf16  conv weight with bias row, lane-padded
    whead_ref:   (CP, CLP)       f32   head weight, pre-scaled by 1/(H*W), padded
    bhead_ref:   (1, CLP)        f32   head bias, padded
    out_ref:     (OUT_ROWS, CLP) f32   logits broadcast over 8 sublanes (aligned store)
    """
    # backbone: 3x3 SAME conv (+bias) as ONE lane-dense MXU matmul, f32 acc.
    feat = jnp.dot(patches_ref[...], wconv_ref[...],
                   preferred_element_type=jnp.float32)            # (H*W, CP)
    feat = jnp.maximum(feat, 0.0)                                 # ReLU (f32 epilogue)

    # head: global average pool (mean scale folded into whead) + linear.
    pooled = jnp.sum(feat, axis=0, keepdims=True)                 # (1, CP) sum-pool
    logits = jnp.dot(pooled, whead_ref[...],
                     preferred_element_type=jnp.float32) + bhead_ref[...]
    out_ref[...] = jnp.broadcast_to(logits, out_ref.shape).astype(out_ref.dtype)


@jax.jit
def grid_detection_forward(x_nchw, params):
    """x_nchw: (N, CIN, H, W) float32 (PyTorch layout). Returns (N, NUM_CLASSES)."""
    wconv, bconv, whead, bhead = params
    n = x_nchw.shape[0]

    # ---- wrapper glue (XLA; fused into the pallas_call operand fetch) ----
    x_nhwc = jnp.transpose(x_nchw, (0, 2, 3, 1))                          # NHWC
    xp = jnp.pad(x_nhwc, ((0, 0), (PAD, PAD), (PAD, PAD), (0, 0)))
    # im2col: 9 shifted windows, (dy,dx,cin) ordering matches wconv.reshape,
    # plus a ones column so the conv bias rides the MXU K dimension for free.
    cols = [xp[:, dy:dy + H, dx:dx + W, :]
            for dy in range(KH) for dx in range(KW)]
    cols.append(jnp.ones((n, H, W, 1), jnp.float32))
    patches = (jnp.concatenate(cols, axis=-1)
               .reshape(n * H * W, KTOT)
               .astype(jnp.bfloat16))                                     # (n*H*W, 37)

    wconv_aug = jnp.concatenate([wconv.reshape(KFLAT, COUT), bconv], axis=0)  # (37, COUT)
    wconv_p = jnp.pad(wconv_aug, ((0, 0), (0, CP - COUT))).astype(jnp.bfloat16)
    # Fold the 1/(H*W) mean-pool scale into the head weight (kept f32).
    whead_p = jnp.pad(whead / float(H * W),
                      ((0, CP - COUT), (0, CLP - NUM_CLASSES)))           # (128, 128)
    bhead_p = jnp.pad(bhead, ((0, 0), (0, CLP - NUM_CLASSES)))            # (1, 128)

    out_p = pl.pallas_call(
        grid_detection_kernel,
        out_shape=jax.ShapeDtypeStruct((n * OUT_ROWS, CLP), jnp.float32),
        grid_spec=pltpu.PrefetchScalarGridSpec(
            num_scalar_prefetch=0,
            grid=(n,),                       # one image per step; shards across v7x TCs
            in_specs=[
                pl.BlockSpec((H * W, KTOT), lambda b: (b, 0)),   # streaming operand
                pl.BlockSpec((KTOT, CP), lambda b: (0, 0)),
                pl.BlockSpec((CP, CLP), lambda b: (0, 0)),
                pl.BlockSpec((1, CLP), lambda b: (0, 0)),
            ],
            out_specs=pl.BlockSpec((OUT_ROWS, CLP), lambda b: (b, 0)),
        ),
        compiler_params=pltpu.CompilerParams(
            dimension_semantics=("parallel",),
            allow_input_fusion=[True, False, False, False]),
    )(patches, wconv_p, whead_p, bhead_p)

    # TODO(synk): when the batch scales, tile the row axis into >=512-row blocks
    # (multiple of 8), accumulate the pooled sum in VMEM scratch with pl.when
    # init/finalize, add pipeline_mode=pl.Buffered(3) on the patches spec if the
    # DMA is still exposed, and set vmem_limit_bytes explicitly (v5e's 16 MiB
    # scoped default and v7x's 64 MiB physical VMEM are hit first).
    return out_p.reshape(n, OUT_ROWS, CLP)[:, 0, :NUM_CLASSES]


def reference_forward(x_nchw, params):
    """Pure-JAX f32 reference (mirrors the PyTorch forward semantics)."""
    wconv, bconv, whead, bhead = params
    x = jnp.transpose(x_nchw, (0, 2, 3, 1))                  # NHWC
    y = jax.lax.conv_general_dilated(
        x, wconv, window_strides=(1, 1), padding="SAME",
        dimension_numbers=("NHWC", "HWIO", "NHWC"))
    y = jnp.maximum(y + bconv.reshape(1, 1, 1, -1), 0.0)
    pooled = jnp.mean(y, axis=(1, 2))                        # (N, COUT)
    return pooled @ whead + bhead                            # (N, NUM_CLASSES)


def init_params(key):
    k1, k2, k3, k4 = jax.random.split(key, 4)
    wconv = 0.1 * jax.random.normal(k1, (KH, KW, CIN, COUT), jnp.float32)
    bconv = 0.1 * jax.random.normal(k2, (1, COUT), jnp.float32)
    whead = 0.1 * jax.random.normal(k3, (COUT, NUM_CLASSES), jnp.float32)
    bhead = 0.1 * jax.random.normal(k4, (1, NUM_CLASSES), jnp.float32)
    return wconv, bconv, whead, bhead


if __name__ == "__main__":
    key = jax.random.PRNGKey(0)
    kx, kp = jax.random.split(key)
    x = jax.random.normal(kx, (N, CIN, H, W), jnp.float32)   # PyTorch NCHW input
    params = init_params(kp)

    out = grid_detection_forward(x, params)
    out = jax.block_until_ready(out)

    ref = jax.block_until_ready(reference_forward(x, params))
    assert out.shape == (N, NUM_CLASSES)
    # bf16 conv inputs (f32 accumulation) vs f32 reference: tolerance loosened
    # per the perf review; observed error is ~1e-3.
    assert jnp.allclose(out, ref, atol=2e-2, rtol=2e-2), "mismatch vs reference"

    print("KERNEL_OK")
</pallas_src>

<mosaic_0001>
module attributes {stable_mosaic.version = 11 : i64} {
  func.func @grid_detection_kernel(%arg0: i32, %arg1: memref<256x37xbf16, #tpu.memory_space<vmem>>, %arg2: memref<37x128xbf16, #tpu.memory_space<vmem>>, %arg3: memref<128x128xf32, #tpu.memory_space<vmem>>, %arg4: memref<1x128xf32, #tpu.memory_space<vmem>>, %arg5: memref<8x128xf32, #tpu.memory_space<vmem>>) attributes {dimension_semantics = [#tpu.dimension_semantics<parallel>], iteration_bounds = array<i64: 2>, scalar_prefetch = 0 : i64, scratch_operands = 0 : i64, tpu.core_type = #tpu.core_type<tc>, window_params = [{transform_indices = @transform_0, window_bounds = array<i64: 256, 37>}, {pipeline_mode = #tpu.pipeline_mode<synchronous>, transform_indices = @transform_1, window_bounds = array<i64: 37, 128>}, {pipeline_mode = #tpu.pipeline_mode<synchronous>, transform_indices = @transform_2, window_bounds = array<i64: 128, 128>}, {pipeline_mode = #tpu.pipeline_mode<synchronous>, transform_indices = @transform_3, window_bounds = array<i64: 1, 128>}, {transform_indices = @transform_4, window_bounds = array<i64: 8, 128>}]} {
    %c0 = arith.constant 0 : index
    %c0_0 = arith.constant 0 : index
    %0 = vector.load %arg1[%c0, %c0_0] : memref<256x37xbf16, #tpu.memory_space<vmem>>, vector<256x37xbf16>
    %c0_1 = arith.constant 0 : index
    %c0_2 = arith.constant 0 : index
    %1 = vector.load %arg2[%c0_1, %c0_2] : memref<37x128xbf16, #tpu.memory_space<vmem>>, vector<37x128xbf16>
    %cst = arith.constant dense<0.000000e+00> : vector<256x128xf32>
    %2 = tpu.matmul %0, %1, %cst {dimension_numbers = #tpu.dot_dimension_numbers<[1], [0], [0], [1], [0, 0, 1, 1], [], []>} : vector<256x37xbf16>, vector<37x128xbf16>, vector<256x128xf32> -> vector<256x128xf32>
    %cst_3 = arith.constant 0.000000e+00 : f32
    %3 = vector.broadcast %cst_3 : f32 to vector<256x128xf32>
    %4 = arith.maximumf %2, %3 : vector<256x128xf32>
    %cst_4 = arith.constant dense<0.000000e+00> : vector<128xf32>
    %5 = vector.multi_reduction <add>, %4, %cst_4 [0] : vector<256x128xf32> to vector<128xf32>
    %6 = vector.shape_cast %5 : vector<128xf32> to vector<1x128xf32>
    %c0_5 = arith.constant 0 : index
    %c0_6 = arith.constant 0 : index
    %7 = vector.load %arg3[%c0_5, %c0_6] : memref<128x128xf32, #tpu.memory_space<vmem>>, vector<128x128xf32>
    %cst_7 = arith.constant dense<0.000000e+00> : vector<1x128xf32>
    %8 = tpu.matmul %6, %7, %cst_7 {dimension_numbers = #tpu.dot_dimension_numbers<[1], [0], [0], [1], [0, 0, 1, 1], [], []>} : vector<1x128xf32>, vector<128x128xf32>, vector<1x128xf32> -> vector<1x128xf32>
    %c0_8 = arith.constant 0 : index
    %c0_9 = arith.constant 0 : index
    %9 = vector.load %arg4[%c0_8, %c0_9] : memref<1x128xf32, #tpu.memory_space<vmem>>, vector<1x128xf32>
    %10 = arith.addf %8, %9 : vector<1x128xf32>
    %11 = vector.shape_cast %10 : vector<1x128xf32> to vector<1x128xf32>
    %12 = vector.broadcast %11 : vector<1x128xf32> to vector<8x128xf32>
    %c0_10 = arith.constant 0 : index
    %c0_11 = arith.constant 0 : index
    %13 = vector.load %arg5[%c0_10, %c0_11] : memref<8x128xf32, #tpu.memory_space<vmem>>, vector<8x128xf32>
    tpu.vector_store %arg5[%c0_10, %c0_11], %12 {strides = array<i32>} : memref<8x128xf32, #tpu.memory_space<vmem>>, vector<8x128xf32>,
    return
  }
  func.func @transform_0(%arg0: i32) -> (i32, i32) {
    %c0_i32 = arith.constant 0 : i32
    %c0_i32_0 = arith.constant 0 : i32
    return %arg0, %c0_i32 : i32, i32
  }
  func.func @transform_1(%arg0: i32) -> (i32, i32) {
    %c0_i32 = arith.constant 0 : i32
    %c0_i32_0 = arith.constant 0 : i32
    %c0_i32_1 = arith.constant 0 : i32
    return %c0_i32, %c0_i32_0 : i32, i32
  }
  func.func @transform_2(%arg0: i32) -> (i32, i32) {
    %c0_i32 = arith.constant 0 : i32
    %c0_i32_0 = arith.constant 0 : i32
    %c0_i32_1 = arith.constant 0 : i32
    return %c0_i32, %c0_i32_0 : i32, i32
  }
  func.func @transform_3(%arg0: i32) -> (i32, i32) {
    %c0_i32 = arith.constant 0 : i32
    %c0_i32_0 = arith.constant 0 : i32
    %c0_i32_1 = arith.constant 0 : i32
    return %c0_i32, %c0_i32_0 : i32, i32
  }
  func.func @transform_4(%arg0: i32) -> (i32, i32) {
    %c0_i32 = arith.constant 0 : i32
    %c0_i32_0 = arith.constant 0 : i32
    return %arg0, %c0_i32 : i32, i32
  }
}

</mosaic_0001>

<llo_original>
// kernel: grid_detection_forward.1
$region0: #{grid_detection_forward.1}
  #allocation0 [shape = 'u32[]', space=smem, size = 0x4, offset = 0x4, fixed_abs, tag = 'smem constant byte address 0x4 - core index']
  #allocation1 [shape = 'u32[144,128]{1,0:T(1,128)}', space=vmem, size = 0x12000, scoped, tag = 'internal scratch']
  %s0 = inlined_call_operand.vmem [shape: bf16[512,37], index: 0, kind: input, shape index: {}]
  %s1 = inlined_call_operand.vmem [shape: bf16[37,128], index: 1, kind: input, shape index: {}]
  %s2 = inlined_call_operand.vmem [shape: f32[128,128], index: 2, kind: input, shape index: {}]
  %s3 = inlined_call_operand.vmem [shape: f32[1,128], index: 3, kind: input, shape index: {}]
  %s4 = inlined_call_operand.vmem [shape: f32[16,128], index: 4, kind: output, shape index: {}]
  %s5 = sld [smem:[#allocation0]]
  $region49: #{grid_detection_forward.1} parent=0
    _
  %s7 = ssub.s32 1, %s5
  %s8 = scalar_select 0, %s7, %s5
  loop: start=0, step=1, limit=4
  $region2: #{grid_detection_forward.1} parent=0 // loop_pre_header
    _
  $region3: #{grid_detection_forward.1} parent=0 // loop_header
    %s10 = sphi 0, %s14
    %p11 = scmp.ge.s32.totalorder %s10, 4
    %s20 = sphi 0, %s22
    %s23 = sphi 0, %s20
    %s24 = sphi 0, %s23
    %s40 = sphi 0, %s24
    %s44 = sphi 0, %s44
    %s46 = sphi 0, %s44
    %s47 = sphi 0, %s46
    %s61 = sphi 0, %s47
    %s65 = sphi 0, %s65
    %s67 = sphi 0, %s65
    %s68 = sphi 0, %s67
    %s82 = sphi 0, %s68
    %s86 = sphi 0, %s86
    %s88 = sphi 0, %s86
    %s89 = sphi 0, %s88
    %s103 = sphi 0, %s89
    %s109 = sphi 0, %s111
    %s112 = sphi 0, %s109
    %s113 = sphi 0, %s112
    %s129 = sphi 0, %s113
  $region4: #{grid_detection_forward.1} parent=0 // loop_header_branch
    %13 = sbr.rel (%p11) target = $region8
  $region5: #{grid_detection_forward.1} parent=0 // loop_body
    %s15 = ssub.s32 %s10, 1
    %s16 = ssub.s32 %s10, 2
    %s17 = sadd.s32 %s10, 1
    %s18 = ssub.s32 %s10, %s17
    %p19 = scmp.eq.s32.totalorder %s18, 0
    %s21 = sadd.s32 %s20, 1
    %s22 = scalar_select %p19, %s20, %s21
    %p25 = pneg %p19
    %p26 = scmp.eq.s32.totalorder %s10, 1
    %p27 = por %p25, %p26
    %p28 = scmp.ne.s32.totalorder %s20, %s23
    %p29 = scmp.eq.s32.totalorder %s10, 0
    %p30 = por %p28, %p29
    %p31 = scmp.ne.s32.totalorder %s20, %s23
    %p32 = scmp.eq.s32.totalorder %s15, 1
    %p33 = por %p31, %p32
    %p34 = scmp.ne.s32.totalorder %s23, %s24
    %p35 = scmp.eq.s32.totalorder %s15, 0
    %p36 = por %p34, %p35
    %p37 = scmp.ne.s32.totalorder %s23, %s24
    %p38 = scmp.eq.s32.totalorder %s16, 1
    %p39 = por %p37, %p38
    %p41 = scmp.ne.s32.totalorder %s24, %s40
    %p42 = scmp.eq.s32.totalorder %s16, 0
    %p43 = por %p41, %p42
    %s45 = sadd.s32 %s44, 1
    %p48 = scmp.eq.s32.totalorder %s10, 1
    %p49 = scmp.ne.s32.totalorder %s44, %s46
    %p50 = scmp.eq.s32.totalorder %s10, 0
    %p51 = por %p49, %p50
    %p52 = scmp.ne.s32.totalorder %s44, %s46
    %p53 = scmp.eq.s32.totalorder %s15, 1
    %p54 = por %p52, %p53
    %p55 = scmp.ne.s32.totalorder %s46, %s47
    %p56 = scmp.eq.s32.totalorder %s15, 0
    %p57 = por %p55, %p56
    %p58 = scmp.ne.s32.totalorder %s46, %s47
    %p59 = scmp.eq.s32.totalorder %s16, 1
    %p60 = por %p58, %p59
    %p62 = scmp.ne.s32.totalorder %s47, %s61
    %p63 = scmp.eq.s32.totalorder %s16, 0
    %p64 = por %p62, %p63
    %s66 = sadd.s32 %s65, 1
    %p69 = scmp.eq.s32.totalorder %s10, 1
    %p70 = scmp.ne.s32.totalorder %s65, %s67
    %p71 = scmp.eq.s32.totalorder %s10, 0
    %p72 = por %p70, %p71
    %p73 = scmp.ne.s32.totalorder %s65, %s67
    %p74 = scmp.eq.s32.totalorder %s15, 1
    %p75 = por %p73, %p74
    %p76 = scmp.ne.s32.totalorder %s67, %s68
    %p77 = scmp.eq.s32.totalorder %s15, 0
    %p78 = por %p76, %p77
    %p79 = scmp.ne.s32.totalorder %s67, %s68
    %p80 = scmp.eq.s32.totalorder %s16, 1
    %p81 = por %p79, %p80
    %p83 = scmp.ne.s32.totalorder %s68, %s82
    %p84 = scmp.eq.s32.totalorder %s16, 0
    %p85 = por %p83, %p84
    %s87 = sadd.s32 %s86, 1
    %p90 = scmp.eq.s32.totalorder %s10, 1
    %p91 = scmp.ne.s32.totalorder %s86, %s88
    %p92 = scmp.eq.s32.totalorder %s10, 0
    %p93 = por %p91, %p92
    %p94 = scmp.ne.s32.totalorder %s86, %s88
    %p95 = scmp.eq.s32.totalorder %s15, 1
    %p96 = por %p94, %p95
    %p97 = scmp.ne.s32.totalorder %s88, %s89
    %p98 = scmp.eq.s32.totalorder %s15, 0
    %p99 = por %p97, %p98
    %p100 = scmp.ne.s32.totalorder %s88, %s89
    %p101 = scmp.eq.s32.totalorder %s16, 1
    %p102 = por %p100, %p101
    %p104 = scmp.ne.s32.totalorder %s89, %s103
    %p105 = scmp.eq.s32.totalorder %s16, 0
    %p106 = por %p104, %p105
    %s107 = ssub.s32 %s10, %s17
    %p108 = scmp.eq.s32.totalorder %s107, 0
    %s110 = sadd.s32 %s109, 1
    %s111 = scalar_select %p108, %s109, %s110
    %p114 = pneg %p108
    %p115 = scmp.eq.s32.totalorder %s10, 1
    %p116 = por %p114, %p115
    %p117 = scmp.ne.s32.totalorder %s109, %s112
    %p118 = scmp.eq.s32.totalorder %s10, 0
    %p119 = por %p117, %p118
    %p120 = scmp.ne.s32.totalorder %s109, %s112
    %p121 = scmp.eq.s32.totalorder %s15, 1
    %p122 = por %p120, %p121
    %p123 = scmp.ne.s32.totalorder %s112, %s113
    %p124 = scmp.eq.s32.totalorder %s15, 0
    %p125 = por %p123, %p124
    %p126 = scmp.ne.s32.totalorder %s112, %s113
    %p127 = scmp.eq.s32.totalorder %s16, 1
    %p128 = por %p126, %p127
    %p130 = scmp.ne.s32.totalorder %s113, %s129
    %p131 = scmp.eq.s32.totalorder %s16, 0
    %p132 = por %p130, %p131
    %p133 = scmp.le.s32.totalorder 1, %s10
    %p134 = scmp.lt.s32.totalorder %s10, 3
    %p135 = pnand %p133, %p134
    %p136 = pneg %p135
    // Predicated region
    $region9: #{grid_detection_forward.1} parent=5 // pred_check
      _
    $region10: #{grid_detection_forward.1} parent=5 // pred_check_branch
      %138 = sbr.rel (%p135) target = $region12
    $region11: #{grid_detection_forward.1} parent=5 // pred_region
      %s139 = ssub.s32 %s10, 1
      // Predicated region
      $region13: #{grid_detection_forward.1} parent=11 // pred_check
        %p140 = pneg %p57
      $region14: #{grid_detection_forward.1} parent=11 // pred_check_branch
        %142 = sbr.rel (%p140) target = $region16
      $region15: #{grid_detection_forward.1} parent=11 // pred_region
        _
      $region16: #{grid_detection_forward.1} parent=11 // pred_fallthru
        _
      // Predicated region
      $region17: #{grid_detection_forward.1} parent=11 // pred_check
        %p143 = pneg %p78
      $region18: #{grid_detection_forward.1} parent=11 // pred_check_branch
        %145 = sbr.rel (%p143) target = $region20
      $region19: #{grid_detection_forward.1} parent=11 // pred_region
        _
      $region20: #{grid_detection_forward.1} parent=11 // pred_fallthru
        _
      // Predicated region
      $region21: #{grid_detection_forward.1} parent=11 // pred_check
        %p146 = pneg %p99
      $region22: #{grid_detection_forward.1} parent=11 // pred_check_branch
        %148 = sbr.rel (%p146) target = $region24
      $region23: #{grid_detection_forward.1} parent=11 // pred_region
        _
      $region24: #{grid_detection_forward.1} parent=11 // pred_fallthru
        _
    $region12: #{grid_detection_forward.1} parent=5 // pred_fallthru
      _
    %p149 = scmp.lt.s32.totalorder %s10, 2
    // Predicated region
    $region25: #{grid_detection_forward.1} parent=5 // pred_check
      %p150 = pneg %p149
    $region26: #{grid_detection_forward.1} parent=5 // pred_check_branch
      %152 = sbr.rel (%p150) target = $region28
    $region27: #{grid_detection_forward.1} parent=5 // pred_region
      // Predicated region
      $region29: #{grid_detection_forward.1} parent=27 // pred_check
        %p153 = pneg %p30
      $region30: #{grid_detection_forward.1} parent=27 // pred_check_branch
        %155 = sbr.rel (%p153) target = $region32
      $region31: #{grid_detection_forward.1} parent=27 // pred_region
        %s156 = smul.u32 32, %s10
        %p157 = scmp.lt.s32.totalorder %s156, 63
        %s158 = scalar_select %p157, %s156, 63
        %s159 = smul.addr %s158, 4
        %s160 = scalar_lea.vmem %s0, %s159
        %s161 = smul.u32 32, %s10
      $region32: #{grid_detection_forward.1} parent=27 // pred_fallthru
        _
    $region28: #{grid_detection_forward.1} parent=5 // pred_fallthru
      _
    %p162 = scmp.le.s32.totalorder 1, %s10
    %p163 = scmp.lt.s32.totalorder %s10, 3
    %p164 = pnand %p162, %p163
    %p165 = pneg %p164
    // Predicated region
    $region33: #{grid_detection_forward.1} parent=5 // pred_check
      _
    $region34: #{grid_detection_forward.1} parent=5 // pred_check_branch
      %167 = sbr.rel (%p164) target = $region36
    $region35: #{grid_detection_forward.1} parent=5 // pred_region
      %s168 = ssub.s32 %s10, 1
      %s169 = smul.u32 32, %s15
      %p170 = scmp.lt.s32.totalorder %s169, 63
      %s171 = scalar_select %p170, %s169, 63
      %s172 = smul.addr %s171, 4
      %s173 = scalar_lea.vmem %s0, %s172
      %p174 = pneg %p36
      %p175 = pneg %p33
      %p176 = pneg %p57
      %p177 = pneg %p54
      %p178 = pneg %p78
      %p179 = pneg %p75
      %p180 = pneg %p99
      %p181 = pneg %p96
      %p182 = pneg %p125
      %p183 = pneg %p122
      %p184 = scmp.lt.s32.totalorder %s15, 1
      %s185 = scalar_select %p184, %s15, 1
      %s186 = smul.addr %s185, 8
      %s187 = scalar_lea.vmem %s4, %s186
      %s188 = smul.u32 32, %s15
      %p189 = scmp.lt.s32.totalorder %s188, 63
      %s190 = scalar_select %p189, %s188, 63
      %s191 = smul.addr %s190, 4
      %s192 = scalar_lea.vmem %s0, %s191
      %s193 = smul.u32 32, %s15
      %p194 = scmp.lt.s32.totalorder %s15, 1
      %s195 = scalar_select %p194, %s15, 1
      %s196 = smul.addr %s195, 8
      %s197 = scalar_lea.vmem %s4, %s196
      %v199 = vld [vmem:[%s192] sm:$0xf]
      %v200 = vld [vmem:[%s192 + $0x4] sm:$0xf]
      %v201 = vld [vmem:[%s192 + $0x8] sm:$0xf]
      %v202 = vld [vmem:[%s192 + $0xc] sm:$0xf]
      %v203 = vld [vmem:[%s192 + $0x10] sm:$0xf]
      %v204 = vld [vmem:[%s192 + $0x14] sm:$0xf]
      %v205 = vld [vmem:[%s192 + $0x18] sm:$0xf]
      %v206 = vld [vmem:[%s192 + $0x1c] sm:$0xf]
      %v207 = vld [vmem:[%s192 + $0x20] sm:$0xf]
      %v208 = vld [vmem:[%s192 + $0x24] sm:$0xf]
      %v209 = vld [vmem:[%s192 + $0x28] sm:$0xf]
      %v210 = vld [vmem:[%s192 + $0x2c] sm:$0xf]
      %v211 = vld [vmem:[%s192 + $0x30] sm:$0xf]
      %v212 = vld [vmem:[%s192 + $0x34] sm:$0xf]
      %v213 = vld [vmem:[%s192 + $0x38] sm:$0xf]
      %v214 = vld [vmem:[%s192 + $0x3c] sm:$0xf]
      %v215 = vld [vmem:[%s192 + $0x40] sm:$0xf]
      %v216 = vld [vmem:[%s192 + $0x44] sm:$0xf]
      %v217 = vld [vmem:[%s192 + $0x48] sm:$0xf]
      %v218 = vld [vmem:[%s192 + $0x4c] sm:$0xf]
      %v219 = vld [vmem:[%s192 + $0x50] sm:$0xf]
      %v220 = vld [vmem:[%s192 + $0x54] sm:$0xf]
      %v221 = vld [vmem:[%s192 + $0x58] sm:$0xf]
      %v222 = vld [vmem:[%s192 + $0x5c] sm:$0xf]
      %v223 = vld [vmem:[%s192 + $0x60] sm:$0xf]
      %v224 = vld [vmem:[%s192 + $0x64] sm:$0xf]
      %v225 = vld [vmem:[%s192 + $0x68] sm:$0xf]
      %v226 = vld [vmem:[%s192 + $0x6c] sm:$0xf]
      %v227 = vld [vmem:[%s192 + $0x70] sm:$0xf]
      %v228 = vld [vmem:[%s192 + $0x74] sm:$0xf]
      %v229 = vld [vmem:[%s192 + $0x78] sm:$0xf]
      %v230 = vld [vmem:[%s192 + $0x7c] sm:$0xf]
      %v231 = vld [vmem:[%s1] sm:$0xf]
      %v232 = vld [vmem:[%s1 + $0x4] sm:$0xf]
      %v233 = vld [vmem:[%s1 + $0x8] sm:$0xf]
      %v234 = vld [vmem:[%s1 + $0xc] sm:$0xf]
      %v235 = vld [vmem:[%s1 + $0x10] sm:$0x7]
      %v268 = vunpack.c.l.b16 %v199
      %v269 = vunpack.c.l.b16 %v200
      %v270 = vunpack.c.l.b16 %v201
      %v271 = vunpack.c.l.b16 %v202
      %v272 = vunpack.c.l.b16 %v203
      %v273 = vunpack.c.l.b16 %v204
      %v274 = vunpack.c.l.b16 %v205
      %v275 = vunpack.c.l.b16 %v206
      %v276 = vunpack.c.l.b16 %v207
      %v277 = vunpack.c.l.b16 %v208
      %v278 = vunpack.c.l.b16 %v209
      %v279 = vunpack.c.l.b16 %v210
      %v280 = vunpack.c.l.b16 %v211
      %v281 = vunpack.c.l.b16 %v212
      %v282 = vunpack.c.l.b16 %v213
      %v283 = vunpack.c.l.b16 %v214
      %v284 = vunpack.c.l.b16 %v215
      %v285 = vunpack.c.l.b16 %v216
      %v286 = vunpack.c.l.b16 %v217
      %v287 = vunpack.c.l.b16 %v218
      %v288 = vunpack.c.l.b16 %v219
      %v289 = vunpack.c.l.b16 %v220
      %v290 = vunpack.c.l.b16 %v221
      %v291 = vunpack.c.l.b16 %v222
      %v292 = vunpack.c.l.b16 %v223
      %v293 = vunpack.c.l.b16 %v224
      %v294 = vunpack.c.l.b16 %v225
      %v295 = vunpack.c.l.b16 %v226
      %v296 = vunpack.c.l.b16 %v227
      %v297 = vunpack.c.l.b16 %v228
      %v298 = vunpack.c.l.b16 %v229
      %v299 = vunpack.c.l.b16 %v230
      %v300 = vpack.c.b16 %v269, %v268
      %v301 = vpack.c.b16 %v271, %v270
      %v302 = vpack.c.b16 %v273, %v272
      %v303 = vpack.c.b16 %v275, %v274
      %v304 = vpack.c.b16 %v277, %v276
      %v305 = vpack.c.b16 %v279, %v278
      %v306 = vpack.c.b16 %v281, %v280
      %v307 = vpack.c.b16 %v283, %v282
      %v308 = vpack.c.b16 %v285, %v284
      %v309 = vpack.c.b16 %v287, %v286
      %v310 = vpack.c.b16 %v289, %v288
      %v311 = vpack.c.b16 %v291, %v290
      %v312 = vpack.c.b16 %v293, %v292
      %v313 = vpack.c.b16 %v295, %v294
      %v314 = vpack.c.b16 %v297, %v296
      %v315 = vpack.c.b16 %v299, %v298
      %v321 = vunpack.c.l.b16 %v231
      %v322 = vunpack.c.l.b16 %v232
      %v323 = vunpack.c.l.b16 %v233
      %v324 = vunpack.c.l.b16 %v234
      %v325 = vunpack.c.l.b16 %v235
      %v326 = vpack.c.b16 %v322, %v321
      %v327 = vpack.c.b16 %v324, %v323
      %v328 = vpack.c.b16 %v325, %v325
      %vm331 = vcmask 302080
      %v333 = vsel %vm331, %v300, 0
      %v336 = vsel %vm331, %v301, 0
      %v339 = vsel %vm331, %v302, 0
      %v342 = vsel %vm331, %v303, 0
      %v345 = vsel %vm331, %v304, 0
      %v348 = vsel %vm331, %v305, 0
      %v351 = vsel %vm331, %v306, 0
      %v354 = vsel %vm331, %v307, 0
      %v357 = vsel %vm331, %v308, 0
      %v360 = vsel %vm331, %v309, 0
      %v363 = vsel %vm331, %v310, 0
      %v366 = vsel %vm331, %v311, 0
      %v369 = vsel %vm331, %v312, 0
      %v372 = vsel %vm331, %v313, 0
      %v375 = vsel %vm331, %v314, 0
      %v378 = vsel %vm331, %v315, 0
      %vm380 = vcmask 1041408
      %vm381 = vcmask 1042432
      %v382 = vsel %vm380, 4294967295, 65535
      %v383 = vsel %vm381, %v382, 0
      %v385 = vand.u32 %v328, %v383
      %387 = vmatprep.subr.bf16.mxu0 0
      %388 = vmatpush1.bf16.msra.mxu0 %v326
      %389 = vmatprep.subr.bf16.mxu0 0
      %390 = vmatpush1.bf16.msra.mxu0 %v327
      %391 = vmatprep.subr.bf16.mxu0 0
      %392 = vmatpush1.bf16.msra.mxu0 %v385
      %393 = vmatprep.subr.bf16.mxu0 0
      %394 = vmatpush1.bf16.msra.mxu0 0
      %395 = vmatprep.subr.bf16.mxu0 0
      %396 = vmatpush1.bf16.msra.mxu0 0
      %397 = vmatprep.subr.bf16.mxu0 0
      %398 = vmatpush1.bf16.msra.mxu0 0
      %399 = vmatprep.subr.bf16.mxu0 0
      %400 = vmatpush1.bf16.msra.mxu0 0
      %401 = vmatprep.subr.bf16.mxu0 0
      %402 = vmatpush1.bf16.msra.mxu0 0
      %403 = vmatprep.subr.bf16.mxu0 0
      %404 = vmatpush1.bf16.msra.mxu0 0
      %405 = vmatprep.subr.bf16.mxu0 0
      %406 = vmatpush1.bf16.msra.mxu0 0
      %407 = vmatprep.subr.bf16.mxu0 0
      %408 = vmatpush1.bf16.msra.mxu0 0
      %409 = vmatprep.subr.bf16.mxu0 0
      %410 = vmatpush1.bf16.msra.mxu0 0
      %411 = vmatprep.subr.bf16.mxu0 0
      %412 = vmatpush1.bf16.msra.mxu0 0
      %413 = vmatprep.subr.bf16.mxu0 0
      %414 = vmatpush1.bf16.msra.mxu0 0
      %415 = vmatprep.subr.bf16.mxu0 0
      %416 = vmatpush1.bf16.msra.mxu0 0
      %417 = vmatprep.subr.bf16.mxu0 0
      %418 = vmatpush1.bf16.msra.mxu0 0
      %419 = vmatprep.mubr.bf16.mxu0 0
      %420 = vmatmul.mubr.bf16.gmra.mrb[0].mxu0 %v333
      %v421 = vpop.f32.mrb[0].mxu0
      %v422 = vadd.f32 0.0, %v421
      %v423 = vpop.f32.mrb[0].mxu0
      %v424 = vpop.f32.mrb[0].mxu0
      %v425 = vadd.f32 0.0, %v424
      %v426 = vpop.f32.mrb[0].mxu0
      %427 = vmatprep.mubr.bf16.mxu0 0
      %428 = vmatmul.mubr.bf16.gmra.mrb[0].mxu0 %v336
      %v429 = vpop.f32.mrb[0].mxu0
      %v430 = vadd.f32 0.0, %v429
      %v431 = vpop.f32.mrb[0].mxu0
      %v432 = vpop.f32.mrb[0].mxu0
      %v433 = vadd.f32 0.0, %v432
      %v434 = vpop.f32.mrb[0].mxu0
      %435 = vmatprep.mubr.bf16.mxu0 0
      %436 = vmatmul.mubr.bf16.gmra.mrb[0].mxu0 %v339
      %v437 = vpop.f32.mrb[0].mxu0
      %v438 = vadd.f32 0.0, %v437
      %v439 = vpop.f32.mrb[0].mxu0
      %v440 = vpop.f32.mrb[0].mxu0
      %v441 = vadd.f32 0.0, %v440
      %v442 = vpop.f32.mrb[0].mxu0
      %443 = vmatprep.mubr.bf16.mxu0 0
      %444 = vmatmul.mubr.bf16.gmra.mrb[0].mxu0 %v342
      %v445 = vpop.f32.mrb[0].mxu0
      %v446 = vadd.f32 0.0, %v445
      %v447 = vpop.f32.mrb[0].mxu0
      %v448 = vpop.f32.mrb[0].mxu0
      %v449 = vadd.f32 0.0, %v448
      %v450 = vpop.f32.mrb[0].mxu0
      %451 = vmatprep.mubr.bf16.mxu0 0
      %452 = vmatmul.mubr.bf16.gmra.mrb[0].mxu0 %v345
      %v453 = vpop.f32.mrb[0].mxu0
      %v454 = vadd.f32 0.0, %v453
      %v455 = vpop.f32.mrb[0].mxu0
      %v456 = vpop.f32.mrb[0].mxu0
      %v457 = vadd.f32 0.0, %v456
      %v458 = vpop.f32.mrb[0].mxu0
      %459 = vmatprep.mubr.bf16.mxu0 0
      %460 = vmatmul.mubr.bf16.gmra.mrb[0].mxu0 %v348
      %v461 = vpop.f32.mrb[0].mxu0
      %v462 = vadd.f32 0.0, %v461
      %v463 = vpop.f32.mrb[0].mxu0
      %v464 = vpop.f32.mrb[0].mxu0
      %v465 = vadd.f32 0.0, %v464
      %v466 = vpop.f32.mrb[0].mxu0
      %467 = vmatprep.mubr.bf16.mxu0 0
      %468 = vmatmul.mubr.bf16.gmra.mrb[0].mxu0 %v351
      %v469 = vpop.f32.mrb[0].mxu0
      %v470 = vadd.f32 0.0, %v469
      %v471 = vpop.f32.mrb[0].mxu0
      %v472 = vpop.f32.mrb[0].mxu0
      %v473 = vadd.f32 0.0, %v472
      %v474 = vpop.f32.mrb[0].mxu0
      %475 = vmatprep.mubr.bf16.mxu0 0
      %476 = vmatmul.mubr.bf16.gmra.mrb[0].mxu0 %v354
      %v477 = vpop.f32.mrb[0].mxu0
      %v478 = vadd.f32 0.0, %v477
      %v479 = vpop.f32.mrb[0].mxu0
      %v480 = vpop.f32.mrb[0].mxu0
      %v481 = vadd.f32 0.0, %v480
      %v482 = vpop.f32.mrb[0].mxu0
      %483 = vmatprep.mubr.bf16.mxu0 0
      %484 = vmatmul.mubr.bf16.gmra.mrb[0].mxu0 %v357
      %v485 = vpop.f32.mrb[0].mxu0
      %v486 = vadd.f32 0.0, %v485
      %v487 = vpop.f32.mrb[0].mxu0
      %v488 = vpop.f32.mrb[0].mxu0
      %v489 = vadd.f32 0.0, %v488
      %v490 = vpop.f32.mrb[0].mxu0
      %491 = vmatprep.mubr.bf16.mxu0 0
      %492 = vmatmul.mubr.bf16.gmra.mrb[0].mxu0 %v360
      %v493 = vpop.f32.mrb[0].mxu0
      %v494 = vadd.f32 0.0, %v493
      %v495 = vpop.f32.mrb[0].mxu0
      %v496 = vpop.f32.mrb[0].mxu0
      %v497 = vadd.f32 0.0, %v496
      %v498 = vpop.f32.mrb[0].mxu0
      %499 = vmatprep.mubr.bf16.mxu0 0
      %500 = vmatmul.mubr.bf16.gmra.mrb[0].mxu0 %v363
      %v501 = vpop.f32.mrb[0].mxu0
      %v502 = vadd.f32 0.0, %v501
      %v503 = vpop.f32.mrb[0].mxu0
      %v504 = vpop.f32.mrb[0].mxu0
      %v505 = vadd.f32 0.0, %v504
      %v506 = vpop.f32.mrb[0].mxu0
      %507 = vmatprep.mubr.bf16.mxu0 0
      %508 = vmatmul.mubr.bf16.gmra.mrb[0].mxu0 %v366
      %v509 = vpop.f32.mrb[0].mxu0
      %v510 = vadd.f32 0.0, %v509
      %v511 = vpop.f32.mrb[0].mxu0
      %v512 = vpop.f32.mrb[0].mxu0
      %v513 = vadd.f32 0.0, %v512
      %v514 = vpop.f32.mrb[0].mxu0
      %515 = vmatprep.mubr.bf16.mxu0 0
      %516 = vmatmul.mubr.bf16.gmra.mrb[0].mxu0 %v369
      %v517 = vpop.f32.mrb[0].mxu0
      %v518 = vadd.f32 0.0, %v517
      %v519 = vpop.f32.mrb[0].mxu0
      %v520 = vpop.f32.mrb[0].mxu0
      %v521 = vadd.f32 0.0, %v520
      %v522 = vpop.f32.mrb[0].mxu0
      %523 = vmatprep.mubr.bf16.mxu0 0
      %524 = vmatmul.mubr.bf16.gmra.mrb[0].mxu0 %v372
      %v525 = vpop.f32.mrb[0].mxu0
      %v526 = vadd.f32 0.0, %v525
      %v527 = vpop.f32.mrb[0].mxu0
      %v528 = vpop.f32.mrb[0].mxu0
      %v529 = vadd.f32 0.0, %v528
      %v530 = vpop.f32.mrb[0].mxu0
      %531 = vmatprep.mubr.bf16.mxu0 0
      %532 = vmatmul.mubr.bf16.gmra.mrb[0].mxu0 %v375
      %v533 = vpop.f32.mrb[0].mxu0
      %v534 = vadd.f32 0.0, %v533
      %v535 = vpop.f32.mrb[0].mxu0
      %v536 = vpop.f32.mrb[0].mxu0
      %v537 = vadd.f32 0.0, %v536
      %v538 = vpop.f32.mrb[0].mxu0
      %539 = vmatprep.mubr.bf16.mxu0 0
      %540 = vmatmul.mubr.bf16.gmra.mrb[0].mxu0 %v378
      %v541 = vpop.f32.mrb[0].mxu0
      %v542 = vadd.f32 0.0, %v541
      %v543 = vpop.f32.mrb[0].mxu0
      %v544 = vpop.f32.mrb[0].mxu0
      %v545 = vadd.f32 0.0, %v544
      %v546 = vpop.f32.mrb[0].mxu0
      %547 = vdwg.mxu0
      %v548 = vmax.f32 %v422, 0.0
      %v549 = vmax.f32 %v425, 0.0
      %v550 = vmax.f32 %v430, 0.0
      %v551 = vmax.f32 %v433, 0.0
      %v552 = vmax.f32 %v438, 0.0
      %v553 = vmax.f32 %v441, 0.0
      %v554 = vmax.f32 %v446, 0.0
      %v555 = vmax.f32 %v449, 0.0
      %v556 = vmax.f32 %v454, 0.0
      %v557 = vmax.f32 %v457, 0.0
      %v558 = vmax.f32 %v462, 0.0
      %v559 = vmax.f32 %v465, 0.0
      %v560 = vmax.f32 %v470, 0.0
      %v561 = vmax.f32 %v473, 0.0
      %v562 = vmax.f32 %v478, 0.0
      %v563 = vmax.f32 %v481, 0.0
      %v564 = vmax.f32 %v486, 0.0
      %v565 = vmax.f32 %v489, 0.0
      %v566 = vmax.f32 %v494, 0.0
      %v567 = vmax.f32 %v497, 0.0
      %v568 = vmax.f32 %v502, 0.0
      %v569 = vmax.f32 %v505, 0.0
      %v570 = vmax.f32 %v510, 0.0
      %v571 = vmax.f32 %v513, 0.0
      %v572 = vmax.f32 %v518, 0.0
      %v573 = vmax.f32 %v521, 0.0
      %v574 = vmax.f32 %v526, 0.0
      %v575 = vmax.f32 %v529, 0.0
      %v576 = vmax.f32 %v534, 0.0
      %v577 = vmax.f32 %v537, 0.0
      %v578 = vmax.f32 %v542, 0.0
      %v579 = vmax.f32 %v545, 0.0
      %v580 = vadd.f32 %v548, %v549
      %v581 = vadd.f32 %v580, %v550
      %v582 = vadd.f32 %v581, %v551
      %v583 = vadd.f32 %v582, %v552
      %v584 = vadd.f32 %v583, %v553
      %v585 = vadd.f32 %v584, %v554
      %v586 = vadd.f32 %v585, %v555
      %v587 = vadd.f32 %v586, %v556
      %v588 = vadd.f32 %v587, %v557
      %v589 = vadd.f32 %v588, %v558
      %v590 = vadd.f32 %v589, %v559
      %v591 = vadd.f32 %v590, %v560
      %v592 = vadd.f32 %v591, %v561
      %v593 = vadd.f32 %v592, %v562
      %v594 = vadd.f32 %v593, %v563
      %v595 = vadd.f32 %v594, %v564
      %v596 = vadd.f32 %v595, %v565
      %v597 = vadd.f32 %v596, %v566
      %v598 = vadd.f32 %v597, %v567
      %v599 = vadd.f32 %v598, %v568
      %v600 = vadd.f32 %v599, %v569
      %v601 = vadd.f32 %v600, %v570
      %v602 = vadd.f32 %v601, %v571
      %v603 = vadd.f32 %v602, %v572
      %v604 = vadd.f32 %v603, %v573
      %v605 = vadd.f32 %v604, %v574
      %v606 = vadd.f32 %v605, %v575
      %v607 = vadd.f32 %v606, %v576
      %v608 = vadd.f32 %v607, %v577
      %v609 = vadd.f32 %v608, %v578
      %v610 = vadd.f32 %v609, %v579
      %v611 = vrot.slane %v610, 4
      %v612 = vadd.f32 %v610, %v611
      %v613 = vrot.slane %v612, 2
      %v614 = vadd.f32 %v612, %v613
      %v615 = vrot.slane %v614, 1
      %v616 = vadd.f32 %v614, %v615
      %v617 = vld [vmem:[%s2] sm:$0xff]
      %v618 = vld [vmem:[%s2 + $0x8] sm:$0xff]
      %v619 = vld [vmem:[%s2 + $0x10] sm:$0xff]
      %v620 = vld [vmem:[%s2 + $0x18] sm:$0xff]
      %v621 = vld [vmem:[%s2 + $0x20] sm:$0xff]
      %v622 = vld [vmem:[%s2 + $0x28] sm:$0xff]
      %v623 = vld [vmem:[%s2 + $0x30] sm:$0xff]
      %v624 = vld [vmem:[%s2 + $0x38] sm:$0xff]
      %v625 = vld [vmem:[%s2 + $0x40] sm:$0xff]
      %v626 = vld [vmem:[%s2 + $0x48] sm:$0xff]
      %v627 = vld [vmem:[%s2 + $0x50] sm:$0xff]
      %v628 = vld [vmem:[%s2 + $0x58] sm:$0xff]
      %v629 = vld [vmem:[%s2 + $0x60] sm:$0xff]
      %v630 = vld [vmem:[%s2 + $0x68] sm:$0xff]
      %v631 = vld [vmem:[%s2 + $0x70] sm:$0xff]
      %v632 = vld [vmem:[%s2 + $0x78] sm:$0xff]
      %v633 = vld [vmem:[%s3] sm:$0x1]
      %634 = vmatprep.subr.mxu0 0.0
      %635 = vmatpush1.msra.mxu0 %v617
      %636 = vmatprep.subr.mxu0 0.0
      %637 = vmatpush1.msra.mxu0 %v618
      %638 = vmatprep.subr.mxu0 0.0
      %639 = vmatpush1.msra.mxu0 %v619
      %640 = vmatprep.subr.mxu0 0.0
      %641 = vmatpush1.msra.mxu0 %v620
      %642 = vmatprep.subr.mxu0 0.0
      %643 = vmatpush1.msra.mxu0 %v621
      %644 = vmatprep.subr.mxu0 0.0
      %645 = vmatpush1.msra.mxu0 %v622
      %646 = vmatprep.subr.mxu0 0.0
      %647 = vmatpush1.msra.mxu0 %v623
      %648 = vmatprep.subr.mxu0 0.0
      %649 = vmatpush1.msra.mxu0 %v624
      %650 = vmatprep.subr.mxu0 0.0
      %651 = vmatpush1.msra.mxu0 %v625
      %652 = vmatprep.subr.mxu0 0.0
      %653 = vmatpush1.msra.mxu0 %v626
      %654 = vmatprep.subr.mxu0 0.0
      %655 = vmatpush1.msra.mxu0 %v627
      %656 = vmatprep.subr.mxu0 0.0
      %657 = vmatpush1.msra.mxu0 %v628
      %658 = vmatprep.subr.mxu0 0.0
      %659 = vmatpush1.msra.mxu0 %v629
      %660 = vmatprep.subr.mxu0 0.0
      %661 = vmatpush1.msra.mxu0 %v630
      %662 = vmatprep.subr.mxu0 0.0
      %663 = vmatpush1.msra.mxu0 %v631
      %664 = vmatprep.subr.mxu0 0.0
      %665 = vmatpush1.msra.mxu0 %v632
      %666 = vmatprep.subr.mxu0 0.0
      %667 = vmatpush1.msra.mxu0 0.0
      %668 = vmatprep.subr.mxu0 0.0
      %669 = vmatpush1.msra.mxu0 0.0
      %670 = vmatprep.subr.mxu0 0.0
      %671 = vmatpush1.msra.mxu0 0.0
      %672 = vmatprep.subr.mxu0 0.0
      %673 = vmatpush1.msra.mxu0 0.0
      %674 = vmatprep.subr.mxu0 0.0
      %675 = vmatpush1.msra.mxu0 0.0
      %676 = vmatprep.subr.mxu0 0.0
      %677 = vmatpush1.msra.mxu0 0.0
      %678 = vmatprep.subr.mxu0 0.0
      %679 = vmatpush1.msra.mxu0 0.0
      %680 = vmatprep.subr.mxu0 0.0
      %681 = vmatpush1.msra.mxu0 0.0
      %682 = vmatprep.subr.mxu0 0.0
      %683 = vmatpush1.msra.mxu0 0.0
      %684 = vmatprep.subr.mxu0 0.0
      %685 = vmatpush1.msra.mxu0 0.0
      %686 = vmatprep.subr.mxu0 0.0
      %687 = vmatpush1.msra.mxu0 0.0
      %688 = vmatprep.subr.mxu0 0.0
      %689 = vmatpush1.msra.mxu0 0.0
      %690 = vmatprep.subr.mxu0 0.0
      %691 = vmatpush1.msra.mxu0 0.0
      %692 = vmatprep.subr.mxu0 0.0
      %693 = vmatpush1.msra.mxu0 0.0
      %694 = vmatprep.subr.mxu0 0.0
      %695 = vmatpush1.msra.mxu0 0.0
      %696 = vmatprep.subr.mxu0 0.0
      %697 = vmatpush1.msra.mxu0 0.0
      %698 = vmatprep.mubr.f32.mxu0 0.0
      %699 = vmatmul.mubr.f32.gmra.mrb[0].mxu0 %v616
      %v700 = vpop.f32.mrb[0].mxu0
      %v701 = vadd.f32 %v633, %v700
      %v702 = vpop.f32.mrb[0].mxu0
      %703 = vdwg.mxu0
      %v704 = vlaneseq
      %v705 = vshrl.u32 %v704, 7
      %v706 = vsub.s32 0, %v705
      %v707 = vrot.slane %v701, %v706
      %708 = vst [vmem:[%s197] sm:$0xff] %v707
      %p709 = scmp.lt.s32.totalorder %s15, 1
      %s710 = scalar_select %p709, %s15, 1
      %s711 = smul.addr %s710, 8
      %s712 = scalar_lea.vmem %s4, %s711
      // Predicated region
      $region37: #{grid_detection_forward.1} parent=35 // pred_check
        %p713 = pneg %p122
      $region38: #{grid_detection_forward.1} parent=35 // pred_check_branch
        %715 = sbr.rel (%p713) target = $region40
      $region39: #{grid_detection_forward.1} parent=35 // pred_region
        _
      $region40: #{grid_detection_forward.1} parent=35 // pred_fallthru
        _
    $region36: #{grid_detection_forward.1} parent=5 // pred_fallthru
      _
    %p716 = scmp.le.s32.totalorder 2, %s10
    // Predicated region
    $region41: #{grid_detection_forward.1} parent=5 // pred_check
      %p717 = pneg %p716
    $region42: #{grid_detection_forward.1} parent=5 // pred_check_branch
      %719 = sbr.rel (%p717) target = $region44
    $region43: #{grid_detection_forward.1} parent=5 // pred_region
      %s720 = ssub.s32 %s10, 2
      // Predicated region
      $region45: #{grid_detection_forward.1} parent=43 // pred_check
        %p721 = pneg %p128
      $region46: #{grid_detection_forward.1} parent=43 // pred_check_branch
        %723 = sbr.rel (%p721) target = $region48
      $region47: #{grid_detection_forward.1} parent=43 // pred_region
        %p724 = scmp.lt.s32.totalorder %s16, 1
        %s725 = scalar_select %p724, %s16, 1
        %s726 = smul.addr %s725, 8
        %s727 = scalar_lea.vmem %s4, %s726
      $region48: #{grid_detection_forward.1} parent=43 // pred_fallthru
        _
    $region44: #{grid_detection_forward.1} parent=5 // pred_fallthru
      _
  $region6: #{grid_detection_forward.1} parent=0 // loop_footer
    %s14 = sadd.s32 1, %s10
  $region7: #{grid_detection_forward.1} parent=0 // loop_footer_branch
    %9 = sbr.rel target = $region3
  $region8: #{grid_detection_forward.1} parent=0 // loop_exit
    _

</llo_original>
